<compile_context>
chip_gen: v6e
topology: v6e:2x2x1
jax: 0.10.0
libtpu: 0.0.40
codegen_flags: <defaults>
</compile_context>

<pallas_src>
import jax
import jax.numpy as jnp
from jax.experimental import pallas as pl
from jax.experimental.pallas import tpu as pltpu


def _ffn_kernel(x_ref, w1_ref, b1_ref, w2_ref, b2_ref, o_ref):
    # x_ref : (tm, D)  row tile        (f32 or bf16)
    # w1_ref: (D, Hp)  b1_ref: (1, Hp) f32
    # w2_ref: (Hp, Dp) b2_ref: (1, Dp) f32
    # o_ref : (tm, Dp) lane-dense output tile
    x = x_ref[...]
    # First matmul: MXU with f32 accumulation; bias + ReLU on the VPU in f32.
    h = jnp.dot(x, w1_ref[...], preferred_element_type=jnp.float32)
    h = jnp.maximum(h + b1_ref[...], 0.0)
    # Second matmul: feed the MXU in the compute dtype, accumulate in f32.
    y = jnp.dot(h.astype(w2_ref.dtype), w2_ref[...],
                preferred_element_type=jnp.float32)
    o_ref[...] = (y + b2_ref[...]).astype(o_ref.dtype)


def _round_up(v, a):
    return ((v + a - 1) // a) * a


def _vmem_capacity_bytes():
    """Physical per-core VMEM with a conservative cross-generation fallback."""
    try:
        info = pltpu.get_tpu_info()
        cap = int(getattr(info, "vmem_capacity_bytes", 0) or 0)
        if cap > 0:
            return cap
    except Exception:
        pass
    return 64 * 1024 * 1024   # v7x per-TC size: safe on every generation


def feed_forward_pallas(x, w1, b1, w2, b2, *, tm=None, compute_dtype=jnp.bfloat16):
    """Feed-forward block: W2(relu(W1(x))).

    Args:
      x : (..., D) input, feature dim last (same as the PyTorch module).
      w1: (D, H) first Linear weight, (in, out) layout.
      b1: (H,)   first Linear bias.
      w2: (H, D) second Linear weight, (in, out) layout.
      b2: (D,)   second Linear bias.
      tm: optional row-tile override (clipped / sublane-aligned automatically).
      compute_dtype: dtype for x / W1 / W2 and the ReLU intermediate (default
        bf16); both matmuls accumulate in f32 and biases are added in f32.
    """
    orig_shape = x.shape
    out_dtype = x.dtype
    D = orig_shape[-1]
    H = w1.shape[1]
    assert w1.shape == (D, H) and w2.shape == (H, D)
    assert b1.shape == (H,) and b2.shape == (D,)

    # ---- Lane-dense padding of the matmul *output* dims.  Done on the weight
    # side only (in a real model this would happen once at parameter init, not
    # per call); zero pads are mathematically inert here.
    Hp = max(_round_up(H, 128), 128)
    Dp = max(_round_up(D, 128), 128)
    if Hp != H:
        w1 = jnp.pad(w1, ((0, 0), (0, Hp - H)))
        b1 = jnp.pad(b1, (0, Hp - H))
        w2 = jnp.pad(w2, ((0, Hp - H), (0, 0)))
    if Dp != D:
        w2 = jnp.pad(w2, ((0, 0), (0, Dp - D)))
        b2 = jnp.pad(b2, (0, Dp - D))

    x2d = x.reshape(-1, D)
    M = x2d.shape[0]

    if compute_dtype is not None:
        x2d = x2d.astype(compute_dtype)
        w1 = w1.astype(compute_dtype)
        w2 = w2.astype(compute_dtype)
    # Biases are added to the f32 accumulator -> keep them f32, as (1, N) rows.
    b1_2d = b1.astype(jnp.float32).reshape(1, Hp)
    b2_2d = b2.astype(jnp.float32).reshape(1, Dp)

    itemsize = jnp.dtype(x2d.dtype).itemsize
    out_itemsize = jnp.dtype(out_dtype).itemsize
    # Sublane alignment for the row dimension: 8 for 32-bit, 16 for bf16.
    row_align = {4: 8, 2: 16, 1: 32}.get(itemsize, 8)

    # ---- Row tile: target a ~2 MiB x slab so each grid step amortizes the
    # ~0.35us per-step overhead even when D is small.
    if tm is None:
        tm = (2 * 1024 * 1024) // max(D * itemsize, 1)
        tm = max(512, min(tm, 8192))
    # At medium/large M, cap tm so the grid has >=4 blocks: with the row axis
    # marked "parallel" this keeps both v7x TensorCores fed.
    if M >= 2048:
        tm = min(tm, _round_up(pl.cdiv(M, 4), row_align))
    # Clip to the (aligned) problem size: tiny problems run as a single block.
    tm = min(tm, _round_up(M, row_align))
    tm = _round_up(max(tm, row_align), row_align)
    grid_m = pl.cdiv(M, tm)

    # ---- VMEM budget (generation-aware cap, ~15% headroom below physical).
    vmem_cap = int(_vmem_capacity_bytes() * 0.85)
    vmem_need = (2 * tm * D * itemsize                 # double-buffered x tiles
                 + 2 * tm * Dp * out_itemsize          # double-buffered out tiles
                 + 2 * (D * Hp + Hp * Dp) * itemsize   # weights (worst-case 2x buffered)
                 + 2 * (Hp + Dp) * 4                   # biases
                 + tm * (Hp + Dp) * 4)                 # f32 h / y intermediates
    vmem_limit = int(min(max(2 * vmem_need, 16 * 1024 * 1024), vmem_cap))

    cost = pl.CostEstimate(
        flops=2 * M * D * Hp + 2 * M * Hp * Dp,
        transcendentals=0,
        bytes_accessed=(M * D * itemsize
                        + (D * Hp + Hp * Dp) * itemsize
                        + (Hp + Dp) * 4
                        + M * Dp * out_itemsize))

    def _call(single_buffer_weights):
        if single_buffer_weights:
            # Grid-invariant operands: nothing to prefetch, so a single buffer
            # halves their resident VMEM footprint.
            def const_spec(shape):
                return pl.BlockSpec(shape, lambda i: (0, 0),
                                    pipeline_mode=pl.Buffered(1))
        else:
            def const_spec(shape):
                return pl.BlockSpec(shape, lambda i: (0, 0))

        return pl.pallas_call(
            _ffn_kernel,
            out_shape=jax.ShapeDtypeStruct((M, Dp), out_dtype),
            grid_spec=pltpu.PrefetchScalarGridSpec(
                num_scalar_prefetch=0,
                grid=(grid_m,),
                in_specs=[
                    pl.BlockSpec((tm, D), lambda i: (i, 0)),   # x row tile
                    const_spec((D, Hp)),                       # W1 (VMEM-resident)
                    const_spec((1, Hp)),                       # b1
                    const_spec((Hp, Dp)),                      # W2 (VMEM-resident)
                    const_spec((1, Dp)),                       # b2
                ],
                out_specs=pl.BlockSpec((tm, Dp), lambda i: (i, 0)),
            ),
            compiler_params=pltpu.CompilerParams(
                dimension_semantics=("parallel",),
                vmem_limit_bytes=vmem_limit),
            cost_estimate=cost,
        )(x2d, w1, b1_2d, w2, b2_2d)

    try:
        out = _call(True)
    except Exception:
        # pipeline_mode=pl.Buffered(1) not supported by this jax/libtpu build:
        # fall back to default (double-buffered) weight specs.
        out = _call(False)

    if Dp != D:
        out = out[:, :D]
    return out.reshape(orig_shape)


if __name__ == "__main__":
    # Model params (small, consistent with the module's __init__).
    embedding_dim = 32
    ff_hidden_dim = 64

    key = jax.random.PRNGKey(0)
    kx, kw1, kb1, kw2, kb2, kx2 = jax.random.split(key, 6)

    # Parameters materialized ONCE in (in, out) layout.  (PyTorch nn.Linear
    # stores (out, in); transposing at init keeps the per-call hot path clean.)
    w1 = jax.random.normal(kw1, (embedding_dim, ff_hidden_dim), jnp.float32) * 0.1
    b1 = jax.random.normal(kb1, (ff_hidden_dim,), jnp.float32) * 0.1
    w2 = jax.random.normal(kw2, (ff_hidden_dim, embedding_dim), jnp.float32) * 0.1
    b2 = jax.random.normal(kb2, (embedding_dim,), jnp.float32) * 0.1

    def reference(x):
        return jnp.maximum(x @ w1 + b1, 0.0) @ w2 + b2

    # 1) Small problem (batch=2, seq=8), exact f32 compute path.
    x_a = jax.random.normal(kx, (2, 8, embedding_dim), jnp.float32)
    out_a = jax.block_until_ready(
        feed_forward_pallas(x_a, w1, b1, w2, b2, compute_dtype=jnp.float32))
    assert out_a.shape == x_a.shape
    assert jnp.allclose(out_a, reference(x_a), atol=1e-5, rtol=1e-5)

    # 2) Ragged row count (batch=3, seq=7 -> M=21): exercises the masked
    #    boundary block (no wrapper-side pad / slice along M).
    x_b = jax.random.normal(kx2, (3, 7, embedding_dim), jnp.float32)
    out_b = jax.block_until_ready(
        feed_forward_pallas(x_b, w1, b1, w2, b2, compute_dtype=jnp.float32))
    assert out_b.shape == x_b.shape
    assert jnp.allclose(out_b, reference(x_b), atol=1e-5, rtol=1e-5)

    # 3) Default bf16 compute path (f32 accumulation) -> looser tolerance.
    out_c = jax.block_until_ready(feed_forward_pallas(x_a, w1, b1, w2, b2))
    assert out_c.shape == x_a.shape
    assert jnp.allclose(out_c, reference(x_a), atol=5e-2, rtol=5e-2)

    print("KERNEL_OK")
</pallas_src>

<mosaic_0001>
module attributes {stable_mosaic.version = 11 : i64} {
  func.func @_ffn_kernel(%arg0: i32, %arg1: memref<16x32xf32, #tpu.memory_space<vmem>>, %arg2: memref<32x128xf32, #tpu.memory_space<vmem>>, %arg3: memref<1x128xf32, #tpu.memory_space<vmem>>, %arg4: memref<128x128xf32, #tpu.memory_space<vmem>>, %arg5: memref<1x128xf32, #tpu.memory_space<vmem>>, %arg6: memref<16x128xf32, #tpu.memory_space<vmem>>) attributes {dimension_semantics = [#tpu.dimension_semantics<parallel>], iteration_bounds = array<i64: 1>, scalar_prefetch = 0 : i64, scratch_operands = 0 : i64, tpu.core_type = #tpu.core_type<tc>, window_params = [{transform_indices = @transform_0, window_bounds = array<i64: 16, 32>}, {pipeline_mode = #tpu.pipeline_mode<synchronous>, transform_indices = @transform_1, window_bounds = array<i64: 32, 128>}, {pipeline_mode = #tpu.pipeline_mode<synchronous>, transform_indices = @transform_2, window_bounds = array<i64: 1, 128>}, {pipeline_mode = #tpu.pipeline_mode<synchronous>, transform_indices = @transform_3, window_bounds = array<i64: 128, 128>}, {pipeline_mode = #tpu.pipeline_mode<synchronous>, transform_indices = @transform_4, window_bounds = array<i64: 1, 128>}, {transform_indices = @transform_5, window_bounds = array<i64: 16, 128>}]} {
    %c0 = arith.constant 0 : index
    %c0_0 = arith.constant 0 : index
    %0 = vector.load %arg1[%c0, %c0_0] : memref<16x32xf32, #tpu.memory_space<vmem>>, vector<16x32xf32>
    %c0_1 = arith.constant 0 : index
    %c0_2 = arith.constant 0 : index
    %1 = vector.load %arg2[%c0_1, %c0_2] : memref<32x128xf32, #tpu.memory_space<vmem>>, vector<32x128xf32>
    %cst = arith.constant dense<0.000000e+00> : vector<16x128xf32>
    %2 = tpu.matmul %0, %1, %cst {dimension_numbers = #tpu.dot_dimension_numbers<[1], [0], [0], [1], [0, 0, 1, 1], [], []>} : vector<16x32xf32>, vector<32x128xf32>, vector<16x128xf32> -> vector<16x128xf32>
    %c0_3 = arith.constant 0 : index
    %c0_4 = arith.constant 0 : index
    %3 = vector.load %arg3[%c0_3, %c0_4] : memref<1x128xf32, #tpu.memory_space<vmem>>, vector<1x128xf32>
    %4 = vector.broadcast %3 : vector<1x128xf32> to vector<16x128xf32>
    %5 = arith.addf %2, %4 : vector<16x128xf32>
    %cst_5 = arith.constant 0.000000e+00 : f32
    %6 = vector.broadcast %cst_5 : f32 to vector<16x128xf32>
    %7 = arith.maximumf %5, %6 : vector<16x128xf32>
    %c0_6 = arith.constant 0 : index
    %c0_7 = arith.constant 0 : index
    %8 = vector.load %arg4[%c0_6, %c0_7] : memref<128x128xf32, #tpu.memory_space<vmem>>, vector<128x128xf32>
    %cst_8 = arith.constant dense<0.000000e+00> : vector<16x128xf32>
    %9 = tpu.matmul %7, %8, %cst_8 {dimension_numbers = #tpu.dot_dimension_numbers<[1], [0], [0], [1], [0, 0, 1, 1], [], []>} : vector<16x128xf32>, vector<128x128xf32>, vector<16x128xf32> -> vector<16x128xf32>
    %c0_9 = arith.constant 0 : index
    %c0_10 = arith.constant 0 : index
    %10 = vector.load %arg5[%c0_9, %c0_10] : memref<1x128xf32, #tpu.memory_space<vmem>>, vector<1x128xf32>
    %11 = vector.broadcast %10 : vector<1x128xf32> to vector<16x128xf32>
    %12 = arith.addf %9, %11 : vector<16x128xf32>
    %c0_11 = arith.constant 0 : index
    %c0_12 = arith.constant 0 : index
    %13 = vector.load %arg6[%c0_11, %c0_12] : memref<16x128xf32, #tpu.memory_space<vmem>>, vector<16x128xf32>
    tpu.vector_store %arg6[%c0_11, %c0_12], %12 {strides = array<i32>} : memref<16x128xf32, #tpu.memory_space<vmem>>, vector<16x128xf32>,
    return
  }
  func.func @transform_0(%arg0: i32) -> (i32, i32) {
    %c0_i32 = arith.constant 0 : i32
    %c0_i32_0 = arith.constant 0 : i32
    return %arg0, %c0_i32 : i32, i32
  }
  func.func @transform_1(%arg0: i32) -> (i32, i32) {
    %c0_i32 = arith.constant 0 : i32
    %c0_i32_0 = arith.constant 0 : i32
    %c0_i32_1 = arith.constant 0 : i32
    return %c0_i32, %c0_i32_0 : i32, i32
  }
  func.func @transform_2(%arg0: i32) -> (i32, i32) {
    %c0_i32 = arith.constant 0 : i32
    %c0_i32_0 = arith.constant 0 : i32
    %c0_i32_1 = arith.constant 0 : i32
    return %c0_i32, %c0_i32_0 : i32, i32
  }
  func.func @transform_3(%arg0: i32) -> (i32, i32) {
    %c0_i32 = arith.constant 0 : i32
    %c0_i32_0 = arith.constant 0 : i32
    %c0_i32_1 = arith.constant 0 : i32
    return %c0_i32, %c0_i32_0 : i32, i32
  }
  func.func @transform_4(%arg0: i32) -> (i32, i32) {
    %c0_i32 = arith.constant 0 : i32
    %c0_i32_0 = arith.constant 0 : i32
    %c0_i32_1 = arith.constant 0 : i32
    return %c0_i32, %c0_i32_0 : i32, i32
  }
  func.func @transform_5(%arg0: i32) -> (i32, i32) {
    %c0_i32 = arith.constant 0 : i32
    %c0_i32_0 = arith.constant 0 : i32
    return %arg0, %c0_i32 : i32, i32
  }
}

module attributes {stable_mosaic.version = 11 : i64} {
  func.func @_ffn_kernel(%arg0: i32, %arg1: memref<16x32xf32, #tpu.memory_space<vmem>>, %arg2: memref<32x128xf32, #tpu.memory_space<vmem>>, %arg3: memref<1x128xf32, #tpu.memory_space<vmem>>, %arg4: memref<128x128xf32, #tpu.memory_space<vmem>>, %arg5: memref<1x128xf32, #tpu.memory_space<vmem>>, %arg6: memref<16x128xf32, #tpu.memory_space<vmem>>) attributes {dimension_semantics = [#tpu.dimension_semantics<parallel>], iteration_bounds = array<i64: 1>, scalar_prefetch = 0 : i64, scratch_operands = 0 : i64, tpu.core_type = #tpu.core_type<tc>, window_params = [{transform_indices = @transform_0, window_bounds = array<i64: 16, 32>}, {pipeline_mode = #tpu.pipeline_mode<synchronous>, transform_indices = @transform_1, window_bounds = array<i64: 32, 128>}, {pipeline_mode = #tpu.pipeline_mode<synchronous>, transform_indices = @transform_2, window_bounds = array<i64: 1, 128>}, {pipeline_mode = #tpu.pipeline_mode<synchronous>, transform_indices = @transform_3, window_bounds = array<i64: 128, 128>}, {pipeline_mode = #tpu.pipeline_mode<synchronous>, transform_indices = @transform_4, window_bounds = array<i64: 1, 128>}, {transform_indices = @transform_5, window_bounds = array<i64: 16, 128>}]} {
    %c0 = arith.constant 0 : index
    %c0_0 = arith.constant 0 : index
    %0 = vector.load %arg1[%c0, %c0_0] : memref<16x32xf32, #tpu.memory_space<vmem>>, vector<16x32xf32>
    %c0_1 = arith.constant 0 : index
    %c0_2 = arith.constant 0 : index
    %1 = vector.load %arg2[%c0_1, %c0_2] : memref<32x128xf32, #tpu.memory_space<vmem>>, vector<32x128xf32>
    %cst = arith.constant dense<0.000000e+00> : vector<16x128xf32>
    %2 = tpu.matmul %0, %1, %cst {dimension_numbers = #tpu.dot_dimension_numbers<[1], [0], [0], [1], [0, 0, 1, 1], [], []>} : vector<16x32xf32>, vector<32x128xf32>, vector<16x128xf32> -> vector<16x128xf32>
    %c0_3 = arith.constant 0 : index
    %c0_4 = arith.constant 0 : index
    %3 = vector.load %arg3[%c0_3, %c0_4] : memref<1x128xf32, #tpu.memory_space<vmem>>, vector<1x128xf32>
    %4 = vector.broadcast %3 : vector<1x128xf32> to vector<16x128xf32>
    %5 = arith.addf %2, %4 : vector<16x128xf32>
    %cst_5 = arith.constant 0.000000e+00 : f32
    %6 = vector.broadcast %cst_5 : f32 to vector<16x128xf32>
    %7 = arith.maximumf %5, %6 : vector<16x128xf32>
    %c0_6 = arith.constant 0 : index
    %c0_7 = arith.constant 0 : index
    %8 = vector.load %arg4[%c0_6, %c0_7] : memref<128x128xf32, #tpu.memory_space<vmem>>, vector<128x128xf32>
    %cst_8 = arith.constant dense<0.000000e+00> : vector<16x128xf32>
    %9 = tpu.matmul %7, %8, %cst_8 {dimension_numbers = #tpu.dot_dimension_numbers<[1], [0], [0], [1], [0, 0, 1, 1], [], []>} : vector<16x128xf32>, vector<128x128xf32>, vector<16x128xf32> -> vector<16x128xf32>
    %c0_9 = arith.constant 0 : index
    %c0_10 = arith.constant 0 : index
    %10 = vector.load %arg5[%c0_9, %c0_10] : memref<1x128xf32, #tpu.memory_space<vmem>>, vector<1x128xf32>
    %11 = vector.broadcast %10 : vector<1x128xf32> to vector<16x128xf32>
    %12 = arith.addf %9, %11 : vector<16x128xf32>
    %c0_11 = arith.constant 0 : index
    %c0_12 = arith.constant 0 : index
    %13 = vector.load %arg6[%c0_11, %c0_12] : memref<16x128xf32, #tpu.memory_space<vmem>>, vector<16x128xf32>
    tpu.vector_store %arg6[%c0_11, %c0_12], %12 {strides = array<i32>} : memref<16x128xf32, #tpu.memory_space<vmem>>, vector<16x128xf32>,
    return
  }
  func.func @transform_0(%arg0: i32) -> (i32, i32) {
    %c0_i32 = arith.constant 0 : i32
    %c0_i32_0 = arith.constant 0 : i32
    return %arg0, %c0_i32 : i32, i32
  }
  func.func @transform_1(%arg0: i32) -> (i32, i32) {
    %c0_i32 = arith.constant 0 : i32
    %c0_i32_0 = arith.constant 0 : i32
    %c0_i32_1 = arith.constant 0 : i32
    return %c0_i32, %c0_i32_0 : i32, i32
  }
  func.func @transform_2(%arg0: i32) -> (i32, i32) {
    %c0_i32 = arith.constant 0 : i32
    %c0_i32_0 = arith.constant 0 : i32
    %c0_i32_1 = arith.constant 0 : i32
    return %c0_i32, %c0_i32_0 : i32, i32
  }
  func.func @transform_3(%arg0: i32) -> (i32, i32) {
    %c0_i32 = arith.constant 0 : i32
    %c0_i32_0 = arith.constant 0 : i32
    %c0_i32_1 = arith.constant 0 : i32
    return %c0_i32, %c0_i32_0 : i32, i32
  }
  func.func @transform_4(%arg0: i32) -> (i32, i32) {
    %c0_i32 = arith.constant 0 : i32
    %c0_i32_0 = arith.constant 0 : i32
    %c0_i32_1 = arith.constant 0 : i32
    return %c0_i32, %c0_i32_0 : i32, i32
  }
  func.func @transform_5(%arg0: i32) -> (i32, i32) {
    %c0_i32 = arith.constant 0 : i32
    %c0_i32_0 = arith.constant 0 : i32
    return %arg0, %c0_i32 : i32, i32
  }
}

</mosaic_0001>

<llo_original>
// kernel: tpu_custom_call.1
$region0: #{tpu_custom_call.1}
  #allocation0 [shape = 'u32[]', space=smem, size = 0x4, offset = 0x4, fixed_abs, tag = 'smem constant byte address 0x4 - core index']
  #allocation1 [shape = 'u32[144,128]{1,0:T(1,128)}', space=vmem, size = 0x12000, scoped, tag = 'internal scratch']
  %s0 = inlined_call_operand.hbm [shape: f32[16,32], index: 0, kind: input, shape index: {}]
  %s1 = inlined_call_operand.hbm [shape: f32[32,128], index: 1, kind: input, shape index: {}]
  %s2 = inlined_call_operand.vmem [shape: f32[1,128], index: 2, kind: input, shape index: {}]
  %s3 = inlined_call_operand.hbm [shape: f32[128,128], index: 3, kind: input, shape index: {}]
  %s4 = inlined_call_operand.vmem [shape: f32[1,128], index: 4, kind: input, shape index: {}]
  %s5 = inlined_call_operand.hbm [shape: f32[16,128], index: 5, kind: output, shape index: {}]
  %s6 = sld [smem:[#allocation0]]
  $region42: #{tpu_custom_call.1} parent=0
    _
  %s8 = ssub.s32 1, %s6
  %s9 = scalar_select 0, %s8, %s6
  $region1: #{tpu_custom_call.1} parent=0
    #allocation2 [shape = 'u8[8192]{0}', space=vmem, size = 0x2000, scoped, tag = 'input window, operand 0, single buffered']
    #allocation3 [shape = 's32[1]{0}', space=sflag, size = 0x4, scoped, tag = 'scoped memory for tpu_custom_call.1']
    #allocation4 [shape = 's32[1]{0}', space=sflag, size = 0x4, scoped, tag = 'scoped memory for tpu_custom_call.1']
    #allocation5 [shape = 'u8[16384]{0}', space=vmem, size = 0x4000, scoped, tag = 'input window, operand 1, single buffered']
    #allocation6 [shape = 's32[1]{0}', space=sflag, size = 0x4, scoped, tag = 'scoped memory for tpu_custom_call.1']
    #allocation7 [shape = 'u8[65536]{0}', space=vmem, size = 0x10000, scoped, tag = 'input window, operand 3, single buffered']
    #allocation8 [shape = 'u8[8192]{0}', space=vmem, size = 0x2000, scoped, tag = 'output window, operand 0, single buffered']
    %10 = vsyncpa [#allocation3], 0
    %11 = vsyncpa [#allocation6], 0
    %12 = vsyncpa [#allocation4], 0
    // Predicated region
    $region2: #{tpu_custom_call.1} parent=1 // pred_check
      _
    $region3: #{tpu_custom_call.1} parent=1 // pred_check_branch
      %14 = sbr.rel (0) target = $region5
    $region4: #{tpu_custom_call.1} parent=1 // pred_region
      %s16 = ssub.s32 256, 256
      %17 = vsyncadd [#allocation3], %s16
      %s18 = sshll.u32 [#allocation2], 4
      %s19 = int_to_ptr.vmem [resolvable:$true] %s18
      %24 = dma.hbm_to_vmem [thread:$0]  %s0, 256, %s19, [#allocation3], 128, 128, 8
    $region5: #{tpu_custom_call.1} parent=1 // pred_fallthru
      _
    // Predicated region
    $region6: #{tpu_custom_call.1} parent=1 // pred_check
      _
    $region7: #{tpu_custom_call.1} parent=1 // pred_check_branch
      %26 = sbr.rel (0) target = $region9
    $region8: #{tpu_custom_call.1} parent=1 // pred_region
      %s28 = ssub.s32 512, 512
      %29 = vsyncadd [#allocation6], %s28
      %s30 = sshll.u32 [#allocation5], 4
      %s31 = int_to_ptr.vmem [resolvable:$true] %s30
      %36 = dma.hbm_to_vmem [thread:$0]  %s1, 512, %s31, [#allocation6], 128, 128, 8
    $region9: #{tpu_custom_call.1} parent=1 // pred_fallthru
      _
    // Predicated region
    $region10: #{tpu_custom_call.1} parent=1 // pred_check
      _
    $region11: #{tpu_custom_call.1} parent=1 // pred_check_branch
      %38 = sbr.rel (0) target = $region13
    $region12: #{tpu_custom_call.1} parent=1 // pred_region
      _
    $region13: #{tpu_custom_call.1} parent=1 // pred_fallthru
      _
    // Predicated region
    $region14: #{tpu_custom_call.1} parent=1 // pred_check
      _
    $region15: #{tpu_custom_call.1} parent=1 // pred_check_branch
      %40 = sbr.rel (0) target = $region17
    $region16: #{tpu_custom_call.1} parent=1 // pred_region
      %s42 = ssub.s32 2048, 2048
      %43 = vsyncadd [#allocation6], %s42
      %s44 = sshll.u32 [#allocation7], 4
      %s45 = int_to_ptr.vmem [resolvable:$true] %s44
      %50 = dma.hbm_to_vmem [thread:$0]  %s3, 2048, %s45, [#allocation6], 128, 128, 8
    $region17: #{tpu_custom_call.1} parent=1 // pred_fallthru
      _
    // Predicated region
    $region18: #{tpu_custom_call.1} parent=1 // pred_check
      _
    $region19: #{tpu_custom_call.1} parent=1 // pred_check_branch
      %52 = sbr.rel (0) target = $region21
    $region20: #{tpu_custom_call.1} parent=1 // pred_region
      _
    $region21: #{tpu_custom_call.1} parent=1 // pred_fallthru
      _
    // Predicated region
    $region22: #{tpu_custom_call.1} parent=1 // pred_check
      _
    $region23: #{tpu_custom_call.1} parent=1 // pred_check_branch
      %54 = sbr.rel (0) target = $region25
    $region24: #{tpu_custom_call.1} parent=1 // pred_region
      %55 = dma.done [#allocation3], 256
    $region25: #{tpu_custom_call.1} parent=1 // pred_fallthru
      _
    // Predicated region
    $region26: #{tpu_custom_call.1} parent=1 // pred_check
      _
    $region27: #{tpu_custom_call.1} parent=1 // pred_check_branch
      %57 = sbr.rel (0) target = $region29
    $region28: #{tpu_custom_call.1} parent=1 // pred_region
      %58 = dma.done [#allocation6], 512
    $region29: #{tpu_custom_call.1} parent=1 // pred_fallthru
      _
    // Predicated region
    $region30: #{tpu_custom_call.1} parent=1 // pred_check
      _
    $region31: #{tpu_custom_call.1} parent=1 // pred_check_branch
      %60 = sbr.rel (0) target = $region33
    $region32: #{tpu_custom_call.1} parent=1 // pred_region
      %61 = dma.done [#allocation6], 2048
    $region33: #{tpu_custom_call.1} parent=1 // pred_fallthru
      _
    %v62 = vld [vmem:[#allocation2] sm:$0xff]
    %v63 = vld [vmem:[#allocation2 + $0x8] sm:$0xff]
    %v64 = vld [vmem:[#allocation5] sm:$0xff]
    %v65 = vld [vmem:[#allocation5 + $0x8] sm:$0xff]
    %v66 = vld [vmem:[#allocation5 + $0x10] sm:$0xff]
    %v67 = vld [vmem:[#allocation5 + $0x18] sm:$0xff]
    %v68 = vld [vmem:[%s2] sm:$0x1]
    %v70 = vlaneseq
    %v71 = vshrl.u32 %v70, 7
    %v72 = vsub.s32 0, %v71
    %v73 = vrot.slane %v68, %v72
    %vm75 = vcmask 261120
    %v77 = vsel %vm75, %v62, 0
    %v80 = vsel %vm75, %v63, 0
    %82 = vmatprep.subr.mxu0 0.0
    %83 = vmatpush1.msra.mxu0 0.0
    %84 = vmatprep.subr.mxu0 0.0
    %85 = vmatpush1.msra.mxu0 0.0
    %86 = vmatprep.subr.mxu0 0.0
    %87 = vmatpush1.msra.mxu0 0.0
    %88 = vmatprep.subr.mxu0 0.0
    %89 = vmatpush1.msra.mxu0 0.0
    %90 = vmatprep.subr.mxu0 0.0
    %91 = vmatpush1.msra.mxu0 0.0
    %92 = vmatprep.subr.mxu0 0.0
    %93 = vmatpush1.msra.mxu0 0.0
    %94 = vmatprep.subr.mxu0 0.0
    %95 = vmatpush1.msra.mxu0 0.0
    %96 = vmatprep.subr.mxu0 0.0
    %97 = vmatpush1.msra.mxu0 0.0
    %98 = vmatprep.subr.mxu0 0.0
    %99 = vmatpush1.msra.mxu0 0.0
    %100 = vmatprep.subr.mxu0 0.0
    %101 = vmatpush1.msra.mxu0 0.0
    %102 = vmatprep.subr.mxu0 0.0
    %103 = vmatpush1.msra.mxu0 0.0
    %104 = vmatprep.subr.mxu0 0.0
    %105 = vmatpush1.msra.mxu0 0.0
    %106 = vmatprep.subr.mxu0 0.0
    %107 = vmatpush1.msra.mxu0 %v67
    %108 = vmatprep.subr.mxu0 0.0
    %109 = vmatpush1.msra.mxu0 %v66
    %110 = vmatprep.subr.mxu0 0.0
    %111 = vmatpush1.msra.mxu0 %v65
    %112 = vmatprep.subr.mxu0 0.0
    %113 = vmatpush1.msra.mxu0 %v64
    %114 = vmatprep.subr.mxu0 0.0
    %115 = vmatpush2.msra.mxu0 0.0
    %116 = vmatprep.subr.mxu0 0.0
    %117 = vmatpush2.msra.mxu0 0.0
    %118 = vmatprep.subr.mxu0 0.0
    %119 = vmatpush2.msra.mxu0 0.0
    %120 = vmatprep.subr.mxu0 0.0
    %121 = vmatpush2.msra.mxu0 0.0
    %122 = vmatprep.subr.mxu0 0.0
    %123 = vmatpush2.msra.mxu0 0.0
    %124 = vmatprep.subr.mxu0 0.0
    %125 = vmatpush2.msra.mxu0 0.0
    %126 = vmatprep.subr.mxu0 0.0
    %127 = vmatpush2.msra.mxu0 0.0
    %128 = vmatprep.subr.mxu0 0.0
    %129 = vmatpush2.msra.mxu0 0.0
    %130 = vmatprep.subr.mxu0 0.0
    %131 = vmatpush2.msra.mxu0 0.0
    %132 = vmatprep.subr.mxu0 0.0
    %133 = vmatpush2.msra.mxu0 0.0
    %134 = vmatprep.subr.mxu0 0.0
    %135 = vmatpush2.msra.mxu0 0.0
    %136 = vmatprep.subr.mxu0 0.0
    %137 = vmatpush2.msra.mxu0 0.0
    %138 = vmatprep.subr.mxu0 0.0
    %139 = vmatpush2.msra.mxu0 0.0
    %140 = vmatprep.subr.mxu0 0.0
    %141 = vmatpush2.msra.mxu0 0.0
    %142 = vmatprep.subr.mxu0 0.0
    %143 = vmatpush2.msra.mxu0 0.0
    %144 = vmatprep.subr.mxu0 0.0
    %145 = vmatpush2.msra.mxu0 0.0
    %146 = vmatprep.mubr.f32.mxu0 0.0
    %147 = vmatmul.mubr.f32.gmra.mxu0 %v77
    %v148 = vpop.f32.mrf.mxu0
    %v149 = vadd.f32 %v73, %v148
    %v150 = vpop.f32.mrf.mxu0
    %151 = vmatprep.mubr.f32.mxu0 0.0
    %152 = vmatmul.mubr.f32.gmra.mxu0 %v80
    %v153 = vpop.f32.mrf.mxu0
    %v154 = vadd.f32 %v73, %v153
    %v155 = vpop.f32.mrf.mxu0
    %156 = vdwg.mxu0
    %v157 = vmax.f32 %v149, 0.0
    %v158 = vmax.f32 %v154, 0.0
    %v159 = vld [vmem:[#allocation7] sm:$0xff]
    %v160 = vld [vmem:[#allocation7 + $0x8] sm:$0xff]
    %v161 = vld [vmem:[#allocation7 + $0x10] sm:$0xff]
    %v162 = vld [vmem:[#allocation7 + $0x18] sm:$0xff]
    %v163 = vld [vmem:[#allocation7 + $0x20] sm:$0xff]
    %v164 = vld [vmem:[#allocation7 + $0x28] sm:$0xff]
    %v165 = vld [vmem:[#allocation7 + $0x30] sm:$0xff]
    %v166 = vld [vmem:[#allocation7 + $0x38] sm:$0xff]
    %v167 = vld [vmem:[#allocation7 + $0x40] sm:$0xff]
    %v168 = vld [vmem:[#allocation7 + $0x48] sm:$0xff]
    %v169 = vld [vmem:[#allocation7 + $0x50] sm:$0xff]
    %v170 = vld [vmem:[#allocation7 + $0x58] sm:$0xff]
    %v171 = vld [vmem:[#allocation7 + $0x60] sm:$0xff]
    %v172 = vld [vmem:[#allocation7 + $0x68] sm:$0xff]
    %v173 = vld [vmem:[#allocation7 + $0x70] sm:$0xff]
    %v174 = vld [vmem:[#allocation7 + $0x78] sm:$0xff]
    %v175 = vld [vmem:[%s4] sm:$0x1]
    %v177 = vlaneseq
    %v178 = vshrl.u32 %v177, 7
    %v179 = vsub.s32 0, %v178
    %v180 = vrot.slane %v175, %v179
    %182 = vmatprep.subr.mxu0 0.0
    %183 = vmatpush1.msra.mxu0 %v174
    %184 = vmatprep.subr.mxu0 0.0
    %185 = vmatpush1.msra.mxu0 %v173
    %186 = vmatprep.subr.mxu0 0.0
    %187 = vmatpush1.msra.mxu0 %v172
    %188 = vmatprep.subr.mxu0 0.0
    %189 = vmatpush1.msra.mxu0 %v171
    %190 = vmatprep.subr.mxu0 0.0
    %191 = vmatpush1.msra.mxu0 %v170
    %192 = vmatprep.subr.mxu0 0.0
    %193 = vmatpush1.msra.mxu0 %v169
    %194 = vmatprep.subr.mxu0 0.0
    %195 = vmatpush1.msra.mxu0 %v168
    %196 = vmatprep.subr.mxu0 0.0
    %197 = vmatpush1.msra.mxu0 %v167
    %198 = vmatprep.subr.mxu0 0.0
    %199 = vmatpush1.msra.mxu0 %v166
    %200 = vmatprep.subr.mxu0 0.0
    %201 = vmatpush1.msra.mxu0 %v165
    %202 = vmatprep.subr.mxu0 0.0
    %203 = vmatpush1.msra.mxu0 %v164
    %204 = vmatprep.subr.mxu0 0.0
    %205 = vmatpush1.msra.mxu0 %v163
    %206 = vmatprep.subr.mxu0 0.0
    %207 = vmatpush1.msra.mxu0 %v162
    %208 = vmatprep.subr.mxu0 0.0
    %209 = vmatpush1.msra.mxu0 %v161
    %210 = vmatprep.subr.mxu0 0.0
    %211 = vmatpush1.msra.mxu0 %v160
    %212 = vmatprep.subr.mxu0 0.0
    %213 = vmatpush1.msra.mxu0 %v159
    %214 = vmatprep.subr.mxu0 0.0
    %215 = vmatpush2.msra.mxu0 0.0
    %216 = vmatprep.subr.mxu0 0.0
    %217 = vmatpush2.msra.mxu0 0.0
    %218 = vmatprep.subr.mxu0 0.0
    %219 = vmatpush2.msra.mxu0 0.0
    %220 = vmatprep.subr.mxu0 0.0
    %221 = vmatpush2.msra.mxu0 0.0
    %222 = vmatprep.subr.mxu0 0.0
    %223 = vmatpush2.msra.mxu0 0.0
    %224 = vmatprep.subr.mxu0 0.0
    %225 = vmatpush2.msra.mxu0 0.0
    %226 = vmatprep.subr.mxu0 0.0
    %227 = vmatpush2.msra.mxu0 0.0
    %228 = vmatprep.subr.mxu0 0.0
    %229 = vmatpush2.msra.mxu0 0.0
    %230 = vmatprep.subr.mxu0 0.0
    %231 = vmatpush2.msra.mxu0 0.0
    %232 = vmatprep.subr.mxu0 0.0
    %233 = vmatpush2.msra.mxu0 0.0
    %234 = vmatprep.subr.mxu0 0.0
    %235 = vmatpush2.msra.mxu0 0.0
    %236 = vmatprep.subr.mxu0 0.0
    %237 = vmatpush2.msra.mxu0 0.0
    %238 = vmatprep.subr.mxu0 0.0
    %239 = vmatpush2.msra.mxu0 0.0
    %240 = vmatprep.subr.mxu0 0.0
    %241 = vmatpush2.msra.mxu0 0.0
    %242 = vmatprep.subr.mxu0 0.0
    %243 = vmatpush2.msra.mxu0 0.0
    %244 = vmatprep.subr.mxu0 0.0
    %245 = vmatpush2.msra.mxu0 0.0
    %246 = vmatprep.mubr.f32.mxu0 0.0
    %247 = vmatmul.mubr.f32.gmra.mxu0 %v157
    %v248 = vpop.f32.mrf.mxu0
    %v249 = vadd.f32 %v180, %v248
    %v250 = vpop.f32.mrf.mxu0
    %251 = vmatprep.mubr.f32.mxu0 0.0
    %252 = vmatmul.mubr.f32.gmra.mxu0 %v158
    %v253 = vpop.f32.mrf.mxu0
    %v254 = vadd.f32 %v180, %v253
    %v255 = vpop.f32.mrf.mxu0
    %256 = vdwg.mxu0
    %257 = vst [vmem:[#allocation8] sm:$0xff] %v249
    %258 = vst [vmem:[#allocation8 + $0x8] sm:$0xff] %v254
    // Predicated region
    $region34: #{tpu_custom_call.1} parent=1 // pred_check
      _
    $region35: #{tpu_custom_call.1} parent=1 // pred_check_branch
      %260 = sbr.rel (0) target = $region37
    $region36: #{tpu_custom_call.1} parent=1 // pred_region
      %s262 = ssub.s32 256, 256
      %263 = vsyncadd [#allocation4], %s262
      %s264 = sshll.u32 [#allocation8], 4
      %s265 = int_to_ptr.vmem [resolvable:$true] %s264
      %270 = dma.vmem_to_hbm [thread:$0]  %s265, 256, %s5, [#allocation4], 128, 128, 8
    $region37: #{tpu_custom_call.1} parent=1 // pred_fallthru
      _
    // Predicated region
    $region38: #{tpu_custom_call.1} parent=1 // pred_check
      _
    $region39: #{tpu_custom_call.1} parent=1 // pred_check_branch
      %272 = sbr.rel (0) target = $region41
    $region40: #{tpu_custom_call.1} parent=1 // pred_region
      %273 = dma.done [#allocation4], 256
    $region41: #{tpu_custom_call.1} parent=1 // pred_fallthru
      _
    %274 = vsyncpa [#allocation3], 1
    %275 = vsyncpa [#allocation6], 1
    %276 = vsyncpa [#allocation4], 1

// kernel: tpu_custom_call.1
$region0: #{tpu_custom_call.1}
  #allocation0 [shape = 'u32[]', space=smem, size = 0x4, offset = 0x4, fixed_abs, tag = 'smem constant byte address 0x4 - core index']
  #allocation1 [shape = 'u32[144,128]{1,0:T(1,128)}', space=vmem, size = 0x12000, scoped, tag = 'internal scratch']
  %s0 = inlined_call_operand.hbm [shape: f32[16,32], index: 0, kind: input, shape index: {}]
  %s1 = inlined_call_operand.hbm [shape: f32[32,128], index: 1, kind: input, shape index: {}]
  %s2 = inlined_call_operand.vmem [shape: f32[1,128], index: 2, kind: input, shape index: {}]
  %s3 = inlined_call_operand.hbm [shape: f32[128,128], index: 3, kind: input, shape index: {}]
  %s4 = inlined_call_operand.vmem [shape: f32[1,128], index: 4, kind: input, shape index: {}]
  %s5 = inlined_call_operand.hbm [shape: f32[16,128], index: 5, kind: output, shape index: {}]
  %s6 = sld [smem:[#allocation0]]
  $region42: #{tpu_custom_call.1} parent=0
    _
  %s8 = ssub.s32 1, %s6
  %s9 = scalar_select 0, %s8, %s6
  $region1: #{tpu_custom_call.1} parent=0
    #allocation2 [shape = 'u8[8192]{0}', space=vmem, size = 0x2000, scoped, tag = 'input window, operand 0, single buffered']
    #allocation3 [shape = 's32[1]{0}', space=sflag, size = 0x4, scoped, tag = 'scoped memory for tpu_custom_call.1']
    #allocation4 [shape = 's32[1]{0}', space=sflag, size = 0x4, scoped, tag = 'scoped memory for tpu_custom_call.1']
    #allocation5 [shape = 'u8[16384]{0}', space=vmem, size = 0x4000, scoped, tag = 'input window, operand 1, single buffered']
    #allocation6 [shape = 's32[1]{0}', space=sflag, size = 0x4, scoped, tag = 'scoped memory for tpu_custom_call.1']
    #allocation7 [shape = 'u8[65536]{0}', space=vmem, size = 0x10000, scoped, tag = 'input window, operand 3, single buffered']
    #allocation8 [shape = 'u8[8192]{0}', space=vmem, size = 0x2000, scoped, tag = 'output window, operand 0, single buffered']
    %10 = vsyncpa [#allocation3], 0
    %11 = vsyncpa [#allocation6], 0
    %12 = vsyncpa [#allocation4], 0
    // Predicated region
    $region2: #{tpu_custom_call.1} parent=1 // pred_check
      _
    $region3: #{tpu_custom_call.1} parent=1 // pred_check_branch
      %14 = sbr.rel (0) target = $region5
    $region4: #{tpu_custom_call.1} parent=1 // pred_region
      %s16 = ssub.s32 256, 256
      %17 = vsyncadd [#allocation3], %s16
      %s18 = sshll.u32 [#allocation2], 4
      %s19 = int_to_ptr.vmem [resolvable:$true] %s18
      %24 = dma.hbm_to_vmem [thread:$0]  %s0, 256, %s19, [#allocation3], 128, 128, 8
    $region5: #{tpu_custom_call.1} parent=1 // pred_fallthru
      _
    // Predicated region
    $region6: #{tpu_custom_call.1} parent=1 // pred_check
      _
    $region7: #{tpu_custom_call.1} parent=1 // pred_check_branch
      %26 = sbr.rel (0) target = $region9
    $region8: #{tpu_custom_call.1} parent=1 // pred_region
      %s28 = ssub.s32 512, 512
      %29 = vsyncadd [#allocation6], %s28
      %s30 = sshll.u32 [#allocation5], 4
      %s31 = int_to_ptr.vmem [resolvable:$true] %s30
      %36 = dma.hbm_to_vmem [thread:$0]  %s1, 512, %s31, [#allocation6], 128, 128, 8
    $region9: #{tpu_custom_call.1} parent=1 // pred_fallthru
      _
    // Predicated region
    $region10: #{tpu_custom_call.1} parent=1 // pred_check
      _
    $region11: #{tpu_custom_call.1} parent=1 // pred_check_branch
      %38 = sbr.rel (0) target = $region13
    $region12: #{tpu_custom_call.1} parent=1 // pred_region
      _
    $region13: #{tpu_custom_call.1} parent=1 // pred_fallthru
      _
    // Predicated region
    $region14: #{tpu_custom_call.1} parent=1 // pred_check
      _
    $region15: #{tpu_custom_call.1} parent=1 // pred_check_branch
      %40 = sbr.rel (0) target = $region17
    $region16: #{tpu_custom_call.1} parent=1 // pred_region
      %s42 = ssub.s32 2048, 2048
      %43 = vsyncadd [#allocation6], %s42
      %s44 = sshll.u32 [#allocation7], 4
      %s45 = int_to_ptr.vmem [resolvable:$true] %s44
      %50 = dma.hbm_to_vmem [thread:$0]  %s3, 2048, %s45, [#allocation6], 128, 128, 8
    $region17: #{tpu_custom_call.1} parent=1 // pred_fallthru
      _
    // Predicated region
    $region18: #{tpu_custom_call.1} parent=1 // pred_check
      _
    $region19: #{tpu_custom_call.1} parent=1 // pred_check_branch
      %52 = sbr.rel (0) target = $region21
    $region20: #{tpu_custom_call.1} parent=1 // pred_region
      _
    $region21: #{tpu_custom_call.1} parent=1 // pred_fallthru
      _
    // Predicated region
    $region22: #{tpu_custom_call.1} parent=1 // pred_check
      _
    $region23: #{tpu_custom_call.1} parent=1 // pred_check_branch
      %54 = sbr.rel (0) target = $region25
    $region24: #{tpu_custom_call.1} parent=1 // pred_region
      %55 = dma.done [#allocation3], 256
    $region25: #{tpu_custom_call.1} parent=1 // pred_fallthru
      _
    // Predicated region
    $region26: #{tpu_custom_call.1} parent=1 // pred_check
      _
    $region27: #{tpu_custom_call.1} parent=1 // pred_check_branch
      %57 = sbr.rel (0) target = $region29
    $region28: #{tpu_custom_call.1} parent=1 // pred_region
      %58 = dma.done [#allocation6], 512
    $region29: #{tpu_custom_call.1} parent=1 // pred_fallthru
      _
    // Predicated region
    $region30: #{tpu_custom_call.1} parent=1 // pred_check
      _
    $region31: #{tpu_custom_call.1} parent=1 // pred_check_branch
      %60 = sbr.rel (0) target = $region33
    $region32: #{tpu_custom_call.1} parent=1 // pred_region
      %61 = dma.done [#allocation6], 2048
    $region33: #{tpu_custom_call.1} parent=1 // pred_fallthru
      _
    %v62 = vld [vmem:[#allocation2] sm:$0xff]
    %v63 = vld [vmem:[#allocation2 + $0x8] sm:$0xff]
    %v64 = vld [vmem:[#allocation5] sm:$0xff]
    %v65 = vld [vmem:[#allocation5 + $0x8] sm:$0xff]
    %v66 = vld [vmem:[#allocation5 + $0x10] sm:$0xff]
    %v67 = vld [vmem:[#allocation5 + $0x18] sm:$0xff]
    %v68 = vld [vmem:[%s2] sm:$0x1]
    %v70 = vlaneseq
    %v71 = vshrl.u32 %v70, 7
    %v72 = vsub.s32 0, %v71
    %v73 = vrot.slane %v68, %v72
    %vm75 = vcmask 261120
    %v77 = vsel %vm75, %v62, 0
    %v80 = vsel %vm75, %v63, 0
    %82 = vmatprep.subr.mxu0 0.0
    %83 = vmatpush1.msra.mxu0 0.0
    %84 = vmatprep.subr.mxu0 0.0
    %85 = vmatpush1.msra.mxu0 0.0
    %86 = vmatprep.subr.mxu0 0.0
    %87 = vmatpush1.msra.mxu0 0.0
    %88 = vmatprep.subr.mxu0 0.0
    %89 = vmatpush1.msra.mxu0 0.0
    %90 = vmatprep.subr.mxu0 0.0
    %91 = vmatpush1.msra.mxu0 0.0
    %92 = vmatprep.subr.mxu0 0.0
    %93 = vmatpush1.msra.mxu0 0.0
    %94 = vmatprep.subr.mxu0 0.0
    %95 = vmatpush1.msra.mxu0 0.0
    %96 = vmatprep.subr.mxu0 0.0
    %97 = vmatpush1.msra.mxu0 0.0
    %98 = vmatprep.subr.mxu0 0.0
    %99 = vmatpush1.msra.mxu0 0.0
    %100 = vmatprep.subr.mxu0 0.0
    %101 = vmatpush1.msra.mxu0 0.0
    %102 = vmatprep.subr.mxu0 0.0
    %103 = vmatpush1.msra.mxu0 0.0
    %104 = vmatprep.subr.mxu0 0.0
    %105 = vmatpush1.msra.mxu0 0.0
    %106 = vmatprep.subr.mxu0 0.0
    %107 = vmatpush1.msra.mxu0 %v67
    %108 = vmatprep.subr.mxu0 0.0
    %109 = vmatpush1.msra.mxu0 %v66
    %110 = vmatprep.subr.mxu0 0.0
    %111 = vmatpush1.msra.mxu0 %v65
    %112 = vmatprep.subr.mxu0 0.0
    %113 = vmatpush1.msra.mxu0 %v64
    %114 = vmatprep.subr.mxu0 0.0
    %115 = vmatpush2.msra.mxu0 0.0
    %116 = vmatprep.subr.mxu0 0.0
    %117 = vmatpush2.msra.mxu0 0.0
    %118 = vmatprep.subr.mxu0 0.0
    %119 = vmatpush2.msra.mxu0 0.0
    %120 = vmatprep.subr.mxu0 0.0
    %121 = vmatpush2.msra.mxu0 0.0
    %122 = vmatprep.subr.mxu0 0.0
    %123 = vmatpush2.msra.mxu0 0.0
    %124 = vmatprep.subr.mxu0 0.0
    %125 = vmatpush2.msra.mxu0 0.0
    %126 = vmatprep.subr.mxu0 0.0
    %127 = vmatpush2.msra.mxu0 0.0
    %128 = vmatprep.subr.mxu0 0.0
    %129 = vmatpush2.msra.mxu0 0.0
    %130 = vmatprep.subr.mxu0 0.0
    %131 = vmatpush2.msra.mxu0 0.0
    %132 = vmatprep.subr.mxu0 0.0
    %133 = vmatpush2.msra.mxu0 0.0
    %134 = vmatprep.subr.mxu0 0.0
    %135 = vmatpush2.msra.mxu0 0.0
    %136 = vmatprep.subr.mxu0 0.0
    %137 = vmatpush2.msra.mxu0 0.0
    %138 = vmatprep.subr.mxu0 0.0
    %139 = vmatpush2.msra.mxu0 0.0
    %140 = vmatprep.subr.mxu0 0.0
    %141 = vmatpush2.msra.mxu0 0.0
    %142 = vmatprep.subr.mxu0 0.0
    %143 = vmatpush2.msra.mxu0 0.0
    %144 = vmatprep.subr.mxu0 0.0
    %145 = vmatpush2.msra.mxu0 0.0
    %146 = vmatprep.mubr.f32.mxu0 0.0
    %147 = vmatmul.mubr.f32.gmra.mxu0 %v77
    %v148 = vpop.f32.mrf.mxu0
    %v149 = vadd.f32 %v73, %v148
    %v150 = vpop.f32.mrf.mxu0
    %151 = vmatprep.mubr.f32.mxu0 0.0
    %152 = vmatmul.mubr.f32.gmra.mxu0 %v80
    %v153 = vpop.f32.mrf.mxu0
    %v154 = vadd.f32 %v73, %v153
    %v155 = vpop.f32.mrf.mxu0
    %156 = vdwg.mxu0
    %v157 = vmax.f32 %v149, 0.0
    %v158 = vmax.f32 %v154, 0.0
    %v159 = vld [vmem:[#allocation7] sm:$0xff]
    %v160 = vld [vmem:[#allocation7 + $0x8] sm:$0xff]
    %v161 = vld [vmem:[#allocation7 + $0x10] sm:$0xff]
    %v162 = vld [vmem:[#allocation7 + $0x18] sm:$0xff]
    %v163 = vld [vmem:[#allocation7 + $0x20] sm:$0xff]
    %v164 = vld [vmem:[#allocation7 + $0x28] sm:$0xff]
    %v165 = vld [vmem:[#allocation7 + $0x30] sm:$0xff]
    %v166 = vld [vmem:[#allocation7 + $0x38] sm:$0xff]
    %v167 = vld [vmem:[#allocation7 + $0x40] sm:$0xff]
    %v168 = vld [vmem:[#allocation7 + $0x48] sm:$0xff]
    %v169 = vld [vmem:[#allocation7 + $0x50] sm:$0xff]
    %v170 = vld [vmem:[#allocation7 + $0x58] sm:$0xff]
    %v171 = vld [vmem:[#allocation7 + $0x60] sm:$0xff]
    %v172 = vld [vmem:[#allocation7 + $0x68] sm:$0xff]
    %v173 = vld [vmem:[#allocation7 + $0x70] sm:$0xff]
    %v174 = vld [vmem:[#allocation7 + $0x78] sm:$0xff]
    %v175 = vld [vmem:[%s4] sm:$0x1]
    %v177 = vlaneseq
    %v178 = vshrl.u32 %v177, 7
    %v179 = vsub.s32 0, %v178
    %v180 = vrot.slane %v175, %v179
    %182 = vmatprep.subr.mxu0 0.0
    %183 = vmatpush1.msra.mxu0 %v174
    %184 = vmatprep.subr.mxu0 0.0
    %185 = vmatpush1.msra.mxu0 %v173
    %186 = vmatprep.subr.mxu0 0.0
    %187 = vmatpush1.msra.mxu0 %v172
    %188 = vmatprep.subr.mxu0 0.0
    %189 = vmatpush1.msra.mxu0 %v171
    %190 = vmatprep.subr.mxu0 0.0
    %191 = vmatpush1.msra.mxu0 %v170
    %192 = vmatprep.subr.mxu0 0.0
    %193 = vmatpush1.msra.mxu0 %v169
    %194 = vmatprep.subr.mxu0 0.0
    %195 = vmatpush1.msra.mxu0 %v168
    %196 = vmatprep.subr.mxu0 0.0
    %197 = vmatpush1.msra.mxu0 %v167
    %198 = vmatprep.subr.mxu0 0.0
    %199 = vmatpush1.msra.mxu0 %v166
    %200 = vmatprep.subr.mxu0 0.0
    %201 = vmatpush1.msra.mxu0 %v165
    %202 = vmatprep.subr.mxu0 0.0
    %203 = vmatpush1.msra.mxu0 %v164
    %204 = vmatprep.subr.mxu0 0.0
    %205 = vmatpush1.msra.mxu0 %v163
    %206 = vmatprep.subr.mxu0 0.0
    %207 = vmatpush1.msra.mxu0 %v162
    %208 = vmatprep.subr.mxu0 0.0
    %209 = vmatpush1.msra.mxu0 %v161
    %210 = vmatprep.subr.mxu0 0.0
    %211 = vmatpush1.msra.mxu0 %v160
    %212 = vmatprep.subr.mxu0 0.0
    %213 = vmatpush1.msra.mxu0 %v159
    %214 = vmatprep.subr.mxu0 0.0
    %215 = vmatpush2.msra.mxu0 0.0
    %216 = vmatprep.subr.mxu0 0.0
    %217 = vmatpush2.msra.mxu0 0.0
    %218 = vmatprep.subr.mxu0 0.0
    %219 = vmatpush2.msra.mxu0 0.0
    %220 = vmatprep.subr.mxu0 0.0
    %221 = vmatpush2.msra.mxu0 0.0
    %222 = vmatprep.subr.mxu0 0.0
    %223 = vmatpush2.msra.mxu0 0.0
    %224 = vmatprep.subr.mxu0 0.0
    %225 = vmatpush2.msra.mxu0 0.0
    %226 = vmatprep.subr.mxu0 0.0
    %227 = vmatpush2.msra.mxu0 0.0
    %228 = vmatprep.subr.mxu0 0.0
    %229 = vmatpush2.msra.mxu0 0.0
    %230 = vmatprep.subr.mxu0 0.0
    %231 = vmatpush2.msra.mxu0 0.0
    %232 = vmatprep.subr.mxu0 0.0
    %233 = vmatpush2.msra.mxu0 0.0
    %234 = vmatprep.subr.mxu0 0.0
    %235 = vmatpush2.msra.mxu0 0.0
    %236 = vmatprep.subr.mxu0 0.0
    %237 = vmatpush2.msra.mxu0 0.0
    %238 = vmatprep.subr.mxu0 0.0
    %239 = vmatpush2.msra.mxu0 0.0
    %240 = vmatprep.subr.mxu0 0.0
    %241 = vmatpush2.msra.mxu0 0.0
    %242 = vmatprep.subr.mxu0 0.0
    %243 = vmatpush2.msra.mxu0 0.0
    %244 = vmatprep.subr.mxu0 0.0
    %245 = vmatpush2.msra.mxu0 0.0
    %246 = vmatprep.mubr.f32.mxu0 0.0
    %247 = vmatmul.mubr.f32.gmra.mxu0 %v157
    %v248 = vpop.f32.mrf.mxu0
    %v249 = vadd.f32 %v180, %v248
    %v250 = vpop.f32.mrf.mxu0
    %251 = vmatprep.mubr.f32.mxu0 0.0
    %252 = vmatmul.mubr.f32.gmra.mxu0 %v158
    %v253 = vpop.f32.mrf.mxu0
    %v254 = vadd.f32 %v180, %v253
    %v255 = vpop.f32.mrf.mxu0
    %256 = vdwg.mxu0
    %257 = vst [vmem:[#allocation8] sm:$0xff] %v249
    %258 = vst [vmem:[#allocation8 + $0x8] sm:$0xff] %v254
    // Predicated region
    $region34: #{tpu_custom_call.1} parent=1 // pred_check
      _
    $region35: #{tpu_custom_call.1} parent=1 // pred_check_branch
      %260 = sbr.rel (0) target = $region37
    $region36: #{tpu_custom_call.1} parent=1 // pred_region
      %s262 = ssub.s32 256, 256
      %263 = vsyncadd [#allocation4], %s262
      %s264 = sshll.u32 [#allocation8], 4
      %s265 = int_to_ptr.vmem [resolvable:$true] %s264
      %270 = dma.vmem_to_hbm [thread:$0]  %s265, 256, %s5, [#allocation4], 128, 128, 8
    $region37: #{tpu_custom_call.1} parent=1 // pred_fallthru
      _
    // Predicated region
    $region38: #{tpu_custom_call.1} parent=1 // pred_check
      _
    $region39: #{tpu_custom_call.1} parent=1 // pred_check_branch
      %272 = sbr.rel (0) target = $region41
    $region40: #{tpu_custom_call.1} parent=1 // pred_region
      %273 = dma.done [#allocation4], 256
    $region41: #{tpu_custom_call.1} parent=1 // pred_fallthru
      _
    %274 = vsyncpa [#allocation3], 1
    %275 = vsyncpa [#allocation6], 1
    %276 = vsyncpa [#allocation4], 1

</llo_original>
